<compile_context>
chip_gen: v7x
topology: tpu7x:2x2x1
jax: 0.10.0
libtpu: 0.0.40
codegen_flags: <defaults>
</compile_context>

<pallas_src>
import jax
import jax.numpy as jnp
from jax.experimental import pallas as pl
from jax.experimental.pallas import tpu as pltpu

H = 32           # hidden_size
O = 16           # output vocab size (o_size)
MAX_LENGTH = 8   # max_length

# ---- bias-pack lane layout: single (1, BIAS_W) f32 vector -------------------
B_GRU  = 0       # [0:128)   b_ir+b_hr | b_iz+b_hz | b_in | b_hn    (4H)
B_ATTN = 128     # [128:136) b_attn                                 (MAX_LENGTH)
B_COMB = 160     # [160:192) b_comb                                 (H)
B_OUT  = 192     # [192:208) b_out                                  (O)
BIAS_W = 256

# ---- weight slab 1 layout: (2H, 256) ----------------------------------------
W1_AC  = 0       # [0:128)   cols 0:8 = W_attn ; cols 8:40 = [W_comb_top; 0]
W1_GRU = 128     # [128:256) [W_ir|W_iz|W_in|0 ; W_hr|W_hz|0|W_hn]
AC_W   = 128

# ---- weight slab 2 layout: (H, 128) ------------------------------------------
W2_CB  = 0       # [0:32)   W_comb bottom half (attn_applied rows)
W2_OUT = 32      # [32:48)  W_out
W2_W   = 128

# ---- packed per-step output row layout: (1, OUT_W) ---------------------------
P_LOGP = 0                       # [0:16)
P_HID  = P_LOGP + O              # [16:48)
P_ATTN = P_HID + H               # [48:56)
OUT_W  = 128


def attn_decoder_loop_kernel(tok_ref, hid_ref, enc_ref, emb_ref,
                             w1_ref, w2_ref, bias_ref,
                             out_ref, xh_sc, h_sc):
    f32 = jnp.float32
    n_steps = tok_ref.shape[0]

    bias   = bias_ref[...]
    b_gru  = bias[:, B_GRU:B_GRU + 4 * H]
    b_attn = bias[:, B_ATTN:B_ATTN + MAX_LENGTH]
    b_comb = bias[:, B_COMB:B_COMB + H]
    b_out  = bias[:, B_OUT:B_OUT + O]

    # Token-independent: project encoder outputs through the attn_applied half
    # of W_comb once, before the time loop (independent dot, off the chain).
    enc_proj = jnp.dot(enc_ref[...], w2_ref[:, W2_CB:W2_CB + H],
                       preferred_element_type=f32)             # (MAX_LENGTH, H)

    # Hidden state stays resident in VMEM scratch across all decode steps.
    h_sc[...] = hid_ref[...]

    @pl.loop(0, n_steps)
    def _(t):
        h = h_sc[...]                                          # (1, H) previous hidden
        idx = tok_ref[t]
        # embedding row gather via dynamic sublane slice (dropout == identity)
        x = emb_ref[pl.ds(idx, 1), :]                          # (1, H)

        # persistent staging buffer: lanes [0:H)=x (later g), lanes [H:2H)=h
        xh_sc[:, :H] = x
        xh_sc[:, H:] = h

        # one lane-dense dot gives [attn_logits | x @ W_comb_top | pad]
        ac = jnp.dot(xh_sc[...], w1_ref[:, W1_AC:W1_AC + AC_W],
                     preferred_element_type=f32)               # (1, 128)
        attn_logits = ac[:, :MAX_LENGTH] + b_attn
        x_comb = ac[:, MAX_LENGTH:MAX_LENGTH + H]

        m = jnp.max(attn_logits, axis=1, keepdims=True)
        e = jnp.exp(attn_logits - m)
        attn_w = e / jnp.sum(e, axis=1, keepdims=True)         # exact softmax

        # attn_applied folded through the precomputed encoder projection
        comb = (x_comb
                + jnp.dot(attn_w, enc_proj, preferred_element_type=f32)
                + b_comb)
        g = jnp.maximum(comb, 0.0)                             # ReLU -> GRU input

        # single fused GRU gate dot: [g | h] @ W_gru -> (1, 4H=128) lane-dense
        xh_sc[:, :H] = g                                       # lanes [H:2H) still hold h
        gru = (jnp.dot(xh_sc[...], w1_ref[:, W1_GRU:W1_GRU + 4 * H],
                       preferred_element_type=f32) + b_gru)
        rz = jax.nn.sigmoid(gru[:, :2 * H])
        r = rz[:, :H]
        z = rz[:, H:]
        n = jnp.tanh(gru[:, 2 * H:3 * H] + r * gru[:, 3 * H:])
        h_new = (1.0 - z) * n + z * h                          # (1, H)

        # output projection + exact log_softmax
        logits = (jnp.dot(h_new, w2_ref[:, W2_OUT:W2_OUT + O],
                          preferred_element_type=f32) + b_out) # (1, O)
        lm = jnp.max(logits, axis=1, keepdims=True)
        sh = logits - lm
        logp = sh - jnp.log(jnp.sum(jnp.exp(sh), axis=1, keepdims=True))

        h_sc[...] = h_new

        pad = jnp.zeros((1, OUT_W - (O + H + MAX_LENGTH)), f32)
        out_ref[pl.ds(t, 1), :] = jnp.concatenate(
            [logp, h_new, attn_w, pad], axis=1)


def init_params(key, h=H, o=O, max_length=MAX_LENGTH, scale=0.1):
    ks = jax.random.split(key, 11)
    f = jnp.float32
    return {
        "embedding": scale * jax.random.normal(ks[0], (o, h), f),
        "W_attn":    scale * jax.random.normal(ks[1], (2 * h, max_length), f),
        "b_attn":    scale * jax.random.normal(ks[2], (1, max_length), f),
        "W_comb":    scale * jax.random.normal(ks[3], (2 * h, h), f),
        "b_comb":    scale * jax.random.normal(ks[4], (1, h), f),
        # GRU weights laid out (in_features, 3*h), gate order [r | z | n]
        "W_ih":      scale * jax.random.normal(ks[5], (h, 3 * h), f),
        "W_hh":      scale * jax.random.normal(ks[6], (h, 3 * h), f),
        "b_ih":      scale * jax.random.normal(ks[7], (1, 3 * h), f),
        "b_hh":      scale * jax.random.normal(ks[8], (1, 3 * h), f),
        "W_out":     scale * jax.random.normal(ks[9], (h, o), f),
        "b_out":     scale * jax.random.normal(ks[10], (1, o), f),
    }


def pack_params(params):
    """Pack/fold parameters ONCE (hoisted off the per-step / per-decode path)."""
    h, o, ml = H, O, MAX_LENGTH
    f = jnp.float32
    wih, whh = params["W_ih"], params["W_hh"]           # (H, 3H), gate order r|z|n
    bih, bhh = params["b_ih"], params["b_hh"]           # (1, 3H)

    # bias pack: [b_ir+b_hr | b_iz+b_hz | b_in | b_hn] | b_attn | b_comb | b_out
    b_gru = jnp.concatenate(
        [bih[:, :h] + bhh[:, :h],
         bih[:, h:2 * h] + bhh[:, h:2 * h],
         bih[:, 2 * h:],
         bhh[:, 2 * h:]], axis=1)                       # (1, 4H)
    bias = jnp.zeros((1, BIAS_W), f)
    bias = bias.at[:, B_GRU:B_GRU + 4 * h].set(b_gru)
    bias = bias.at[:, B_ATTN:B_ATTN + ml].set(params["b_attn"])
    bias = bias.at[:, B_COMB:B_COMB + h].set(params["b_comb"])
    bias = bias.at[:, B_OUT:B_OUT + o].set(params["b_out"])

    # slab 1 (2H, 256): [W_attn | W_comb_top | pad]  |  fused GRU weights
    w_ac = jnp.zeros((2 * h, AC_W), f)
    w_ac = w_ac.at[:, :ml].set(params["W_attn"])
    w_ac = w_ac.at[:h, ml:ml + h].set(params["W_comb"][:h, :])
    w_gru = jnp.zeros((2 * h, 4 * h), f)
    w_gru = w_gru.at[:h, :2 * h].set(wih[:, :2 * h])        # g rows: r | z
    w_gru = w_gru.at[h:, :2 * h].set(whh[:, :2 * h])        # h rows: r | z
    w_gru = w_gru.at[:h, 2 * h:3 * h].set(wih[:, 2 * h:])   # g rows: n (input)
    w_gru = w_gru.at[h:, 3 * h:].set(whh[:, 2 * h:])        # h rows: n (hidden)
    w1 = jnp.concatenate([w_ac, w_gru], axis=1)             # (64, 256)

    # slab 2 (H, 128): [W_comb bottom half | W_out | pad]
    w2 = jnp.zeros((h, W2_W), f)
    w2 = w2.at[:, W2_CB:W2_CB + h].set(params["W_comb"][h:, :])
    w2 = w2.at[:, W2_OUT:W2_OUT + o].set(params["W_out"])

    return {"embedding": params["embedding"], "w1": w1, "w2": w2, "bias": bias}


def attn_decoder_decode(packed, tokens, hidden, encoder_outputs):
    """Fused teacher-forced decode: all T steps in ONE pallas_call.

    tokens:           int32 (T,)     input token per step
    hidden:           f32   (1, 1, H) initial hidden
    encoder_outputs:  f32   (MAX_LENGTH, H)
    returns (log_probs (T, O), hiddens (T, H), attn_weights (T, MAX_LENGTH))
    """
    tok = tokens.reshape(-1).astype(jnp.int32)
    T = tok.shape[0]
    hid = hidden.reshape(1, H)

    smem = pl.BlockSpec(memory_space=pltpu.MemorySpace.SMEM)
    vmem = pl.BlockSpec(memory_space=pltpu.MemorySpace.VMEM)

    out = pl.pallas_call(
        attn_decoder_loop_kernel,
        out_shape=jax.ShapeDtypeStruct((T, OUT_W), jnp.float32),
        in_specs=[smem] + [vmem] * 6,
        out_specs=vmem,
        scratch_shapes=[pltpu.VMEM((1, 2 * H), jnp.float32),   # [x|h] / [g|h] staging
                        pltpu.VMEM((1, H), jnp.float32)],      # resident hidden state
    )(tok, hid, encoder_outputs,
      packed["embedding"], packed["w1"], packed["w2"], packed["bias"])

    log_probs = out[:, P_LOGP:P_LOGP + O]
    hiddens = out[:, P_HID:P_HID + H]
    attn_w = out[:, P_ATTN:P_ATTN + MAX_LENGTH]
    return log_probs, hiddens, attn_w


def attn_decoder_forward(packed, input_idx, hidden, encoder_outputs):
    """Single decoder step — same signature/semantics as the PyTorch forward()."""
    logp, hiddens, attn_w = attn_decoder_decode(
        packed, input_idx.reshape(-1), hidden, encoder_outputs)
    return logp, hiddens[-1:].reshape(1, 1, H), attn_w


# ---- pure-JAX reference (mirrors the PyTorch module, eval mode) --------------
def ref_step(params, idx, hidden, enc):
    hp = jax.lax.Precision.HIGHEST
    x = params["embedding"][idx][None, :]
    h = hidden.reshape(1, H)
    xh = jnp.concatenate([x, h], axis=1)
    aw = jax.nn.softmax(jnp.dot(xh, params["W_attn"], precision=hp)
                        + params["b_attn"], axis=1)
    applied = jnp.dot(aw, enc, precision=hp)
    xa = jnp.concatenate([x, applied], axis=1)
    g = jax.nn.relu(jnp.dot(xa, params["W_comb"], precision=hp) + params["b_comb"])
    gi = jnp.dot(g, params["W_ih"], precision=hp) + params["b_ih"]
    gh = jnp.dot(h, params["W_hh"], precision=hp) + params["b_hh"]
    r = jax.nn.sigmoid(gi[:, :H] + gh[:, :H])
    z = jax.nn.sigmoid(gi[:, H:2 * H] + gh[:, H:2 * H])
    n = jnp.tanh(gi[:, 2 * H:] + r * gh[:, 2 * H:])
    h_new = (1.0 - z) * n + z * h
    logits = jnp.dot(h_new, params["W_out"], precision=hp) + params["b_out"]
    logp = jax.nn.log_softmax(logits, axis=1)
    return logp, h_new.reshape(1, 1, H), aw


if __name__ == "__main__":
    key = jax.random.PRNGKey(0)
    k_params, k_enc = jax.random.split(key)

    params = init_params(k_params)
    packed = pack_params(params)   # done once, outside the decode path

    tokens = jnp.array([3, 7, 1, 11], dtype=jnp.int32)           # teacher-forced inputs
    hidden0 = jnp.zeros((1, 1, H), dtype=jnp.float32)            # initHidden()
    encoder_outputs = jax.random.normal(k_enc, (MAX_LENGTH, H), jnp.float32)

    # fused multi-step decode (one kernel launch for all 4 steps)
    decode = jax.jit(attn_decoder_decode)
    logp, hids, attn_w = jax.block_until_ready(
        decode(packed, tokens, hidden0, encoder_outputs))
    assert logp.shape == (4, O)
    assert hids.shape == (4, H)
    assert attn_w.shape == (4, MAX_LENGTH)

    # structural checks (exact softmax / log_softmax paths)
    assert float(jnp.max(jnp.abs(attn_w.sum(axis=1) - 1.0))) < 1e-5
    assert float(jnp.max(jnp.abs(jnp.exp(logp).sum(axis=1) - 1.0))) < 1e-4

    # step-by-step cross-check against the pure-JAX reference
    h = hidden0
    for t in range(tokens.shape[0]):
        r_logp, h, r_attn = ref_step(params, int(tokens[t]), h, encoder_outputs)
        assert jnp.allclose(logp[t:t + 1], r_logp, atol=5e-3, rtol=5e-3), t
        assert jnp.allclose(attn_w[t:t + 1], r_attn, atol=5e-3, rtol=5e-3), t
        assert jnp.allclose(hids[t:t + 1], h.reshape(1, H), atol=5e-3, rtol=5e-3), t

    # single-step wrapper (the original module's forward() signature)
    step = jax.jit(attn_decoder_forward)
    s_logp, s_hid, s_attn = jax.block_until_ready(
        step(packed, jnp.array([[3]], jnp.int32), hidden0, encoder_outputs))
    assert s_logp.shape == (1, O)
    assert s_hid.shape == (1, 1, H)
    assert s_attn.shape == (1, MAX_LENGTH)
    assert jnp.allclose(s_logp, logp[:1], atol=1e-6)

    print("KERNEL_OK")
</pallas_src>

<mosaic_0001>
module attributes {stable_mosaic.version = 11 : i64} {
  func.func @attn_decoder_loop_kernel(%arg0: memref<4xi32, #tpu.memory_space<smem>>, %arg1: memref<1x32xf32, #tpu.memory_space<vmem>>, %arg2: memref<8x32xf32, #tpu.memory_space<vmem>>, %arg3: memref<16x32xf32, #tpu.memory_space<vmem>>, %arg4: memref<64x256xf32, #tpu.memory_space<vmem>>, %arg5: memref<32x128xf32, #tpu.memory_space<vmem>>, %arg6: memref<1x256xf32, #tpu.memory_space<vmem>>, %arg7: memref<4x128xf32, #tpu.memory_space<vmem>>, %arg8: memref<1x64xf32, #tpu.memory_space<vmem>>, %arg9: memref<1x32xf32, #tpu.memory_space<vmem>>) attributes {dimension_semantics = [], scalar_prefetch = 0 : i64, scratch_operands = 2 : i64, tpu.core_type = #tpu.core_type<tc>} {
    %c0 = arith.constant 0 : index
    %c0_0 = arith.constant 0 : index
    %0 = vector.load %arg6[%c0, %c0_0] : memref<1x256xf32, #tpu.memory_space<vmem>>, vector<1x256xf32>
    %1 = vector.extract_strided_slice %0 {offsets = [0, 0], sizes = [1, 128], strides = [1, 1]} : vector<1x256xf32> to vector<1x128xf32>
    %2 = vector.extract_strided_slice %0 {offsets = [0, 128], sizes = [1, 8], strides = [1, 1]} : vector<1x256xf32> to vector<1x8xf32>
    %3 = vector.extract_strided_slice %0 {offsets = [0, 160], sizes = [1, 32], strides = [1, 1]} : vector<1x256xf32> to vector<1x32xf32>
    %4 = vector.extract_strided_slice %0 {offsets = [0, 192], sizes = [1, 16], strides = [1, 1]} : vector<1x256xf32> to vector<1x16xf32>
    %c0_1 = arith.constant 0 : index
    %c0_2 = arith.constant 0 : index
    %5 = vector.load %arg2[%c0_1, %c0_2] : memref<8x32xf32, #tpu.memory_space<vmem>>, vector<8x32xf32>
    %c0_3 = arith.constant 0 : index
    %c0_4 = arith.constant 0 : index
    %6 = vector.load %arg5[%c0_3, %c0_4] : memref<32x128xf32, #tpu.memory_space<vmem>>, vector<32x32xf32>
    %cst = arith.constant dense<0.000000e+00> : vector<8x32xf32>
    %7 = tpu.matmul %5, %6, %cst {dimension_numbers = #tpu.dot_dimension_numbers<[1], [0], [0], [1], [0, 0, 1, 1], [], []>} : vector<8x32xf32>, vector<32x32xf32>, vector<8x32xf32> -> vector<8x32xf32>
    %c0_5 = arith.constant 0 : index
    %c0_6 = arith.constant 0 : index
    %8 = vector.load %arg1[%c0_5, %c0_6] : memref<1x32xf32, #tpu.memory_space<vmem>>, vector<1x32xf32>
    %c0_7 = arith.constant 0 : index
    %c0_8 = arith.constant 0 : index
    %9 = vector.load %arg9[%c0_7, %c0_8] : memref<1x32xf32, #tpu.memory_space<vmem>>, vector<1x32xf32>
    tpu.vector_store %arg9[%c0_7, %c0_8], %8 {strides = array<i32>} : memref<1x32xf32, #tpu.memory_space<vmem>>, vector<1x32xf32>,
    %c0_i32 = arith.constant 0 : i32
    %c4_i32 = arith.constant 4 : i32
    %10 = arith.addi %c0_i32, %c4_i32 : i32
    %c1_i32 = arith.constant 1 : i32
    scf.for %arg10 = %c0_i32 to %10 step %c1_i32  : i32 {
      %c1_i32_10 = arith.constant 1 : i32
      %11 = arith.muli %arg10, %c1_i32_10 : i32
      %c0_i32_11 = arith.constant 0 : i32
      %12 = arith.addi %c0_i32_11, %11 : i32
      %c0_12 = arith.constant 0 : index
      %c0_13 = arith.constant 0 : index
      %13 = vector.load %arg9[%c0_12, %c0_13] : memref<1x32xf32, #tpu.memory_space<vmem>>, vector<1x32xf32>
      %14 = arith.index_cast %12 : i32 to index
      %15 = memref.load %arg0[%14] : memref<4xi32, #tpu.memory_space<smem>>
      %16 = arith.index_cast %15 : i32 to index
      %c0_14 = arith.constant 0 : index
      %17 = vector.load %arg3[%16, %c0_14] : memref<16x32xf32, #tpu.memory_space<vmem>>, vector<1x32xf32>
      %c0_15 = arith.constant 0 : index
      %c0_16 = arith.constant 0 : index
      %18 = vector.load %arg8[%c0_15, %c0_16] : memref<1x64xf32, #tpu.memory_space<vmem>>, vector<1x32xf32>
      tpu.vector_store %arg8[%c0_15, %c0_16], %17 {strides = array<i32>} : memref<1x64xf32, #tpu.memory_space<vmem>>, vector<1x32xf32>,
      %c0_17 = arith.constant 0 : index
      %c32 = arith.constant 32 : index
      %19 = vector.load %arg8[%c0_17, %c32] : memref<1x64xf32, #tpu.memory_space<vmem>>, vector<1x32xf32>
      tpu.vector_store %arg8[%c0_17, %c32], %13 {strides = array<i32>} : memref<1x64xf32, #tpu.memory_space<vmem>>, vector<1x32xf32>,
      %c0_18 = arith.constant 0 : index
      %c0_19 = arith.constant 0 : index
      %20 = vector.load %arg8[%c0_18, %c0_19] : memref<1x64xf32, #tpu.memory_space<vmem>>, vector<1x64xf32>
      %c0_20 = arith.constant 0 : index
      %c0_21 = arith.constant 0 : index
      %21 = vector.load %arg4[%c0_20, %c0_21] : memref<64x256xf32, #tpu.memory_space<vmem>>, vector<64x128xf32>
      %cst_22 = arith.constant dense<0.000000e+00> : vector<1x128xf32>
      %22 = tpu.matmul %20, %21, %cst_22 {dimension_numbers = #tpu.dot_dimension_numbers<[1], [0], [0], [1], [0, 0, 1, 1], [], []>} : vector<1x64xf32>, vector<64x128xf32>, vector<1x128xf32> -> vector<1x128xf32>
      %23 = vector.extract_strided_slice %22 {offsets = [0, 0], sizes = [1, 8], strides = [1, 1]} : vector<1x128xf32> to vector<1x8xf32>
      %24 = arith.addf %23, %2 : vector<1x8xf32>
      %25 = vector.extract_strided_slice %22 {offsets = [0, 8], sizes = [1, 32], strides = [1, 1]} : vector<1x128xf32> to vector<1x32xf32>
      %cst_23 = arith.constant dense<0xFF800000> : vector<1xf32>
      %26 = vector.multi_reduction <maximumf>, %24, %cst_23 [1] : vector<1x8xf32> to vector<1xf32>
      %27 = vector.shape_cast %26 : vector<1xf32> to vector<1x1xf32>
      %28 = vector.broadcast %27 : vector<1x1xf32> to vector<1x8xf32>
      %29 = arith.subf %24, %28 : vector<1x8xf32>
      %30 = math.exp %29 : vector<1x8xf32>
      %cst_24 = arith.constant dense<0.000000e+00> : vector<1xf32>
      %31 = vector.multi_reduction <add>, %30, %cst_24 [1] : vector<1x8xf32> to vector<1xf32>
      %32 = vector.shape_cast %31 : vector<1xf32> to vector<1x1xf32>
      %33 = vector.broadcast %32 : vector<1x1xf32> to vector<1x8xf32>
      %34 = arith.divf %30, %33 : vector<1x8xf32>
      %cst_25 = arith.constant dense<0.000000e+00> : vector<1x32xf32>
      %35 = tpu.matmul %34, %7, %cst_25 {dimension_numbers = #tpu.dot_dimension_numbers<[1], [0], [0], [1], [0, 0, 1, 1], [], []>} : vector<1x8xf32>, vector<8x32xf32>, vector<1x32xf32> -> vector<1x32xf32>
      %36 = arith.addf %25, %35 : vector<1x32xf32>
      %37 = arith.addf %36, %3 : vector<1x32xf32>
      %cst_26 = arith.constant 0.000000e+00 : f32
      %38 = vector.broadcast %cst_26 : f32 to vector<1x32xf32>
      %39 = arith.maximumf %37, %38 : vector<1x32xf32>
      %c0_27 = arith.constant 0 : index
      %c0_28 = arith.constant 0 : index
      %40 = vector.load %arg8[%c0_27, %c0_28] : memref<1x64xf32, #tpu.memory_space<vmem>>, vector<1x32xf32>
      tpu.vector_store %arg8[%c0_27, %c0_28], %39 {strides = array<i32>} : memref<1x64xf32, #tpu.memory_space<vmem>>, vector<1x32xf32>,
      %c0_29 = arith.constant 0 : index
      %c0_30 = arith.constant 0 : index
      %41 = vector.load %arg8[%c0_29, %c0_30] : memref<1x64xf32, #tpu.memory_space<vmem>>, vector<1x64xf32>
      %c0_31 = arith.constant 0 : index
      %c128 = arith.constant 128 : index
      %42 = vector.load %arg4[%c0_31, %c128] : memref<64x256xf32, #tpu.memory_space<vmem>>, vector<64x128xf32>
      %cst_32 = arith.constant dense<0.000000e+00> : vector<1x128xf32>
      %43 = tpu.matmul %41, %42, %cst_32 {dimension_numbers = #tpu.dot_dimension_numbers<[1], [0], [0], [1], [0, 0, 1, 1], [], []>} : vector<1x64xf32>, vector<64x128xf32>, vector<1x128xf32> -> vector<1x128xf32>
      %44 = arith.addf %43, %1 : vector<1x128xf32>
      %45 = vector.extract_strided_slice %44 {offsets = [0, 0], sizes = [1, 64], strides = [1, 1]} : vector<1x128xf32> to vector<1x64xf32>
      %46 = arith.negf %45 : vector<1x64xf32>
      %47 = math.exp %46 : vector<1x64xf32>
      %cst_33 = arith.constant 1.000000e+00 : f32
      %48 = vector.broadcast %cst_33 : f32 to vector<1x64xf32>
      %49 = arith.addf %48, %47 : vector<1x64xf32>
      %50 = arith.divf %48, %49 : vector<1x64xf32>
      %51 = vector.extract_strided_slice %50 {offsets = [0, 0], sizes = [1, 32], strides = [1, 1]} : vector<1x64xf32> to vector<1x32xf32>
      %52 = vector.extract_strided_slice %50 {offsets = [0, 32], sizes = [1, 32], strides = [1, 1]} : vector<1x64xf32> to vector<1x32xf32>
      %53 = vector.extract_strided_slice %44 {offsets = [0, 64], sizes = [1, 32], strides = [1, 1]} : vector<1x128xf32> to vector<1x32xf32>
      %54 = vector.extract_strided_slice %44 {offsets = [0, 96], sizes = [1, 32], strides = [1, 1]} : vector<1x128xf32> to vector<1x32xf32>
      %55 = arith.mulf %51, %54 : vector<1x32xf32>
      %56 = arith.addf %53, %55 : vector<1x32xf32>
      %57 = math.tanh %56 : vector<1x32xf32>
      %cst_34 = arith.constant 1.000000e+00 : f32
      %58 = vector.broadcast %cst_34 : f32 to vector<1x32xf32>
      %59 = arith.subf %58, %52 : vector<1x32xf32>
      %60 = arith.mulf %59, %57 : vector<1x32xf32>
      %61 = arith.mulf %52, %13 : vector<1x32xf32>
      %62 = arith.addf %60, %61 : vector<1x32xf32>
      %c0_35 = arith.constant 0 : index
      %c32_36 = arith.constant 32 : index
      %63 = vector.load %arg5[%c0_35, %c32_36] : memref<32x128xf32, #tpu.memory_space<vmem>>, vector<32x16xf32>
      %cst_37 = arith.constant dense<0.000000e+00> : vector<1x16xf32>
      %64 = tpu.matmul %62, %63, %cst_37 {dimension_numbers = #tpu.dot_dimension_numbers<[1], [0], [0], [1], [0, 0, 1, 1], [], []>} : vector<1x32xf32>, vector<32x16xf32>, vector<1x16xf32> -> vector<1x16xf32>
      %65 = arith.addf %64, %4 : vector<1x16xf32>
      %cst_38 = arith.constant dense<0xFF800000> : vector<1xf32>
      %66 = vector.multi_reduction <maximumf>, %65, %cst_38 [1] : vector<1x16xf32> to vector<1xf32>
      %67 = vector.shape_cast %66 : vector<1xf32> to vector<1x1xf32>
      %68 = vector.broadcast %67 : vector<1x1xf32> to vector<1x16xf32>
      %69 = arith.subf %65, %68 : vector<1x16xf32>
      %70 = math.exp %69 : vector<1x16xf32>
      %cst_39 = arith.constant dense<0.000000e+00> : vector<1xf32>
      %71 = vector.multi_reduction <add>, %70, %cst_39 [1] : vector<1x16xf32> to vector<1xf32>
      %72 = vector.shape_cast %71 : vector<1xf32> to vector<1x1xf32>
      %73 = math.log %72 : vector<1x1xf32>
      %74 = vector.broadcast %73 : vector<1x1xf32> to vector<1x16xf32>
      %75 = arith.subf %69, %74 : vector<1x16xf32>
      %c0_40 = arith.constant 0 : index
      %c0_41 = arith.constant 0 : index
      %76 = vector.load %arg9[%c0_40, %c0_41] : memref<1x32xf32, #tpu.memory_space<vmem>>, vector<1x32xf32>
      tpu.vector_store %arg9[%c0_40, %c0_41], %62 {strides = array<i32>} : memref<1x32xf32, #tpu.memory_space<vmem>>, vector<1x32xf32>,
      %cst_42 = arith.constant 0.000000e+00 : f32
      %77 = vector.broadcast %cst_42 : f32 to vector<1x72xf32>
      %78 = tpu.concatenate %75, %62, %34, %77 in 1 : vector<1x16xf32>, vector<1x32xf32>, vector<1x8xf32>, vector<1x72xf32> -> vector<1x128xf32>
      %79 = arith.index_cast %12 : i32 to index
      %c0_43 = arith.constant 0 : index
      %80 = vector.load %arg7[%79, %c0_43] : memref<4x128xf32, #tpu.memory_space<vmem>>, vector<1x128xf32>
      tpu.vector_store %arg7[%79, %c0_43], %78 {strides = array<i32>} : memref<4x128xf32, #tpu.memory_space<vmem>>, vector<1x128xf32>,
    }
    %c4_i32_9 = arith.constant 4 : i32
    return
  }
}

</mosaic_0001>

<llo_original>
// kernel: attn_decoder_decode.1
$region0: #{attn_decoder_decode.1}
  #allocation0 [shape = 'u32[]', space=smem, size = 0x4, offset = 0x4, fixed_abs, tag = 'smem constant byte address 0x4 - core index']
  #allocation1 [shape = 'u32[144,128]{1,0:T(1,128)}', space=vmem, size = 0x12000, scoped, tag = 'internal scratch']
  #allocation2 [shape = 'f32[1,64]{1,0:T(1,128)}', space=vmem, size = 0x200, scoped, tag = 'scratch operand']
  #allocation3 [shape = 'f32[1,32]{1,0:T(1,128)}', space=vmem, size = 0x200, scoped, tag = 'scratch operand']
  %s0 = inlined_call_operand.vmem [shape: s32[4], index: 0, kind: input, shape index: {}]
  %s1 = inlined_call_operand.vmem [shape: f32[1,32], index: 1, kind: input, shape index: {}]
  %s2 = inlined_call_operand.vmem [shape: f32[8,32], index: 2, kind: input, shape index: {}]
  %s3 = inlined_call_operand.hbm [shape: f32[16,32], index: 3, kind: input, shape index: {}]
  %s4 = inlined_call_operand.hbm [shape: f32[64,256], index: 4, kind: input, shape index: {}]
  %s5 = inlined_call_operand.hbm [shape: f32[32,128], index: 5, kind: input, shape index: {}]
  %s6 = inlined_call_operand.vmem [shape: f32[1,256], index: 6, kind: input, shape index: {}]
  %s7 = inlined_call_operand.vmem [shape: f32[4,128], index: 7, kind: output, shape index: {}]
  %s8 = sld [smem:[#allocation0]]
  $region61: #{attn_decoder_decode.1} parent=0
    _
  %s10 = ssub.s32 1, %s8
  %s11 = scalar_select 0, %s10, %s8
  $region1: #{attn_decoder_decode.1} parent=0
    #allocation4 [shape = 'u8[512]{0}', space=smem, size = 0x200, scoped, tag = 'input window, operand 0, single buffered']
    #allocation5 [shape = 's32[1]{0}', space=sflag, size = 0x4, scoped, tag = 'scoped memory for attn_decoder_decode.1']
    #allocation6 [shape = 's32[1]{0}', space=sflag, size = 0x4, scoped, tag = 'scoped memory for attn_decoder_decode.1']
    #allocation7 [shape = 'u8[8192]{0}', space=vmem, size = 0x2000, scoped, tag = 'input window, operand 3, single buffered']
    #allocation8 [shape = 'u8[65536]{0}', space=vmem, size = 0x10000, scoped, tag = 'input window, operand 4, single buffered']
    #allocation9 [shape = 's32[1]{0}', space=sflag, size = 0x4, scoped, tag = 'scoped memory for attn_decoder_decode.1']
    #allocation10 [shape = 'u8[16384]{0}', space=vmem, size = 0x4000, scoped, tag = 'input window, operand 5, single buffered']
    %12 = vsyncpa [#allocation6], 0
    %13 = vsyncpa [#allocation5], 0
    %14 = vsyncpa [#allocation9], 0
    // Predicated region
    $region2: #{attn_decoder_decode.1} parent=1 // pred_check
      _
    $region3: #{attn_decoder_decode.1} parent=1 // pred_check_branch
      %16 = sbr.rel (0) target = $region5
    $region4: #{attn_decoder_decode.1} parent=1 // pred_region
      %s18 = ssub.s32 16, 16
      %19 = vsyncadd [#allocation6], %s18
      %s21 = sshll.u32 %s0, 4
      %s22 = int_to_ptr.vmem [resolvable:$true] %s21
      %24 = dma.vmem_to_smem %s22, 16, [#allocation4], [#allocation6]
    $region5: #{attn_decoder_decode.1} parent=1 // pred_fallthru
      _
    // Predicated region
    $region6: #{attn_decoder_decode.1} parent=1 // pred_check
      _
    $region7: #{attn_decoder_decode.1} parent=1 // pred_check_branch
      %26 = sbr.rel (0) target = $region9
    $region8: #{attn_decoder_decode.1} parent=1 // pred_region
      _
    $region9: #{attn_decoder_decode.1} parent=1 // pred_fallthru
      _
    // Predicated region
    $region10: #{attn_decoder_decode.1} parent=1 // pred_check
      _
    $region11: #{attn_decoder_decode.1} parent=1 // pred_check_branch
      %28 = sbr.rel (0) target = $region13
    $region12: #{attn_decoder_decode.1} parent=1 // pred_region
      _
    $region13: #{attn_decoder_decode.1} parent=1 // pred_fallthru
      _
    // Predicated region
    $region14: #{attn_decoder_decode.1} parent=1 // pred_check
      _
    $region15: #{attn_decoder_decode.1} parent=1 // pred_check_branch
      %30 = sbr.rel (0) target = $region17
    $region16: #{attn_decoder_decode.1} parent=1 // pred_region
      %s32 = ssub.s32 256, 256
      %33 = vsyncadd [#allocation5], %s32
      %s34 = sshll.u32 [#allocation7], 4
      %s35 = int_to_ptr.vmem [resolvable:$true] %s34
      %40 = dma.hbm_to_vmem [thread:$0]  %s3, 256, %s35, [#allocation5], 128, 128, 8
    $region17: #{attn_decoder_decode.1} parent=1 // pred_fallthru
      _
    // Predicated region
    $region18: #{attn_decoder_decode.1} parent=1 // pred_check
      _
    $region19: #{attn_decoder_decode.1} parent=1 // pred_check_branch
      %42 = sbr.rel (0) target = $region21
    $region20: #{attn_decoder_decode.1} parent=1 // pred_region
      %s44 = ssub.s32 2048, 2048
      %45 = vsyncadd [#allocation9], %s44
      %s46 = sshll.u32 [#allocation8], 4
      %s47 = int_to_ptr.vmem [resolvable:$true] %s46
      %52 = dma.hbm_to_vmem [thread:$0]  %s4, 2048, %s47, [#allocation9], 256, 256, 16
    $region21: #{attn_decoder_decode.1} parent=1 // pred_fallthru
      _
    // Predicated region
    $region22: #{attn_decoder_decode.1} parent=1 // pred_check
      _
    $region23: #{attn_decoder_decode.1} parent=1 // pred_check_branch
      %54 = sbr.rel (0) target = $region25
    $region24: #{attn_decoder_decode.1} parent=1 // pred_region
      %s56 = ssub.s32 512, 512
      %57 = vsyncadd [#allocation9], %s56
      %s58 = sshll.u32 [#allocation10], 4
      %s59 = int_to_ptr.vmem [resolvable:$true] %s58
      %64 = dma.hbm_to_vmem [thread:$0]  %s5, 512, %s59, [#allocation9], 128, 128, 8
    $region25: #{attn_decoder_decode.1} parent=1 // pred_fallthru
      _
    // Predicated region
    $region26: #{attn_decoder_decode.1} parent=1 // pred_check
      _
    $region27: #{attn_decoder_decode.1} parent=1 // pred_check_branch
      %66 = sbr.rel (0) target = $region29
    $region28: #{attn_decoder_decode.1} parent=1 // pred_region
      _
    $region29: #{attn_decoder_decode.1} parent=1 // pred_fallthru
      _
    // Predicated region
    $region30: #{attn_decoder_decode.1} parent=1 // pred_check
      _
    $region31: #{attn_decoder_decode.1} parent=1 // pred_check_branch
      %68 = sbr.rel (0) target = $region33
    $region32: #{attn_decoder_decode.1} parent=1 // pred_region
      %69 = dma.done [#allocation6], 16
    $region33: #{attn_decoder_decode.1} parent=1 // pred_fallthru
      _
    // Predicated region
    $region34: #{attn_decoder_decode.1} parent=1 // pred_check
      _
    $region35: #{attn_decoder_decode.1} parent=1 // pred_check_branch
      %71 = sbr.rel (0) target = $region37
    $region36: #{attn_decoder_decode.1} parent=1 // pred_region
      %72 = dma.done [#allocation5], 256
    $region37: #{attn_decoder_decode.1} parent=1 // pred_fallthru
      _
    // Predicated region
    $region38: #{attn_decoder_decode.1} parent=1 // pred_check
      _
    $region39: #{attn_decoder_decode.1} parent=1 // pred_check_branch
      %74 = sbr.rel (0) target = $region41
    $region40: #{attn_decoder_decode.1} parent=1 // pred_region
      %75 = dma.done [#allocation9], 2048
    $region41: #{attn_decoder_decode.1} parent=1 // pred_fallthru
      _
    // Predicated region
    $region42: #{attn_decoder_decode.1} parent=1 // pred_check
      _
    $region43: #{attn_decoder_decode.1} parent=1 // pred_check_branch
      %77 = sbr.rel (0) target = $region45
    $region44: #{attn_decoder_decode.1} parent=1 // pred_region
      %78 = dma.done [#allocation9], 512
    $region45: #{attn_decoder_decode.1} parent=1 // pred_fallthru
      _
    %79 = sfence
    %v80 = vld [vmem:[%s6] sm:$0x3]
    %v81 = vld [vmem:[%s2] sm:$0xff]
    %v82 = vld [vmem:[#allocation10] sm:$0xff]
    %v83 = vld [vmem:[#allocation10 + $0x8] sm:$0xff]
    %v84 = vld [vmem:[#allocation10 + $0x10] sm:$0xff]
    %v85 = vld [vmem:[#allocation10 + $0x18] sm:$0xff]
    %vm86 = vcmask 261120
    %v88 = vsel %vm86, %v81, 0
    %90 = vmatprep.subr.mxu0 0.0
    %91 = vmatpush1.msra.mxu0 %v82
    %92 = vmatprep.subr.mxu0 0.0
    %93 = vmatpush1.msra.mxu0 %v83
    %94 = vmatprep.subr.mxu0 0.0
    %95 = vmatpush1.msra.mxu0 %v84
    %96 = vmatprep.subr.mxu0 0.0
    %97 = vmatpush1.msra.mxu0 %v85
    %98 = vmatprep.subr.mxu0 0.0
    %99 = vmatpush1.msra.mxu0 0.0
    %100 = vmatprep.subr.mxu0 0.0
    %101 = vmatpush1.msra.mxu0 0.0
    %102 = vmatprep.subr.mxu0 0.0
    %103 = vmatpush1.msra.mxu0 0.0
    %104 = vmatprep.subr.mxu0 0.0
    %105 = vmatpush1.msra.mxu0 0.0
    %106 = vmatprep.subr.mxu0 0.0
    %107 = vmatpush1.msra.mxu0 0.0
    %108 = vmatprep.subr.mxu0 0.0
    %109 = vmatpush1.msra.mxu0 0.0
    %110 = vmatprep.subr.mxu0 0.0
    %111 = vmatpush1.msra.mxu0 0.0
    %112 = vmatprep.subr.mxu0 0.0
    %113 = vmatpush1.msra.mxu0 0.0
    %114 = vmatprep.subr.mxu0 0.0
    %115 = vmatpush1.msra.mxu0 0.0
    %116 = vmatprep.subr.mxu0 0.0
    %117 = vmatpush1.msra.mxu0 0.0
    %118 = vmatprep.subr.mxu0 0.0
    %119 = vmatpush1.msra.mxu0 0.0
    %120 = vmatprep.subr.mxu0 0.0
    %121 = vmatpush1.msra.mxu0 0.0
    %122 = vmatprep.subr.mxu0 0.0
    %123 = vmatpush1.msra.mxu0 0.0
    %124 = vmatprep.subr.mxu0 0.0
    %125 = vmatpush1.msra.mxu0 0.0
    %126 = vmatprep.subr.mxu0 0.0
    %127 = vmatpush1.msra.mxu0 0.0
    %128 = vmatprep.subr.mxu0 0.0
    %129 = vmatpush1.msra.mxu0 0.0
    %130 = vmatprep.subr.mxu0 0.0
    %131 = vmatpush1.msra.mxu0 0.0
    %132 = vmatprep.subr.mxu0 0.0
    %133 = vmatpush1.msra.mxu0 0.0
    %134 = vmatprep.subr.mxu0 0.0
    %135 = vmatpush1.msra.mxu0 0.0
    %136 = vmatprep.subr.mxu0 0.0
    %137 = vmatpush1.msra.mxu0 0.0
    %138 = vmatprep.subr.mxu0 0.0
    %139 = vmatpush1.msra.mxu0 0.0
    %140 = vmatprep.subr.mxu0 0.0
    %141 = vmatpush1.msra.mxu0 0.0
    %142 = vmatprep.subr.mxu0 0.0
    %143 = vmatpush1.msra.mxu0 0.0
    %144 = vmatprep.subr.mxu0 0.0
    %145 = vmatpush1.msra.mxu0 0.0
    %146 = vmatprep.subr.mxu0 0.0
    %147 = vmatpush1.msra.mxu0 0.0
    %148 = vmatprep.subr.mxu0 0.0
    %149 = vmatpush1.msra.mxu0 0.0
    %150 = vmatprep.subr.mxu0 0.0
    %151 = vmatpush1.msra.mxu0 0.0
    %152 = vmatprep.subr.mxu0 0.0
    %153 = vmatpush1.msra.mxu0 0.0
    %154 = vmatprep.mubr.f32.mxu0 0.0
    %155 = vmatmul.mubr.f32.gmra.mrb[0].mxu0 %v88
    %v156 = vpop.f32.mrb[0].mxu0
    %v157 = vadd.f32 0.0, %v156
    %v158 = vpop.f32.mrb[0].mxu0
    %159 = vdwg.mxu0
    %v160 = vld [vmem:[%s1] sm:$0x1]
    %vm161 = vcmask 253952
    %162 = vst.msk [vmem:[#allocation3] sm:$0x1] %vm161, %v160
    loop: start=0, step=1, limit=4
    $region46: #{attn_decoder_decode.1} parent=1 // loop_pre_header
      _
    $region47: #{attn_decoder_decode.1} parent=1 // loop_header
      %s164 = sphi 0, %s168
      %p165 = scmp.ge.s32.totalorder %s164, 4
    $region48: #{attn_decoder_decode.1} parent=1 // loop_header_branch
      %167 = sbr.rel (%p165) target = $region52
    $region49: #{attn_decoder_decode.1} parent=1 // loop_body
      %v169 = vld [vmem:[#allocation3] sm:$0x1]
      %s170 = sld [smem:[#allocation4 + %s164]]
      %s171 = scalar_lea.vmem [#allocation7], %s170
      %v172 = vld [vmem:[%s171] sm:$0x1]
      %173 = vst.msk [vmem:[#allocation2] sm:$0x1] %vm161, %v172
      %v175 = vlaneseq
      %v176 = vshrl.u32 %v175, 7
      %v177 = vsub.s32 0, %v176
      %v178 = vrot.slane %v169, %v177
      %179 = vrot.lane.b32.xlu0 %v178, 32
      %v180 = vpop.permute.xlu0 %179
      %vm182 = vcmask 516352
      %183 = vst.msk [vmem:[#allocation2] sm:$0x1] %vm182, %v180
      %v184 = vld [vmem:[#allocation2] sm:$0x1]
      %v185 = vld [vmem:[#allocation8] sm:$0xff]
      %v186 = vld [vmem:[#allocation8 + $0x10] sm:$0xff]
      %v187 = vld [vmem:[#allocation8 + $0x20] sm:$0xff]
      %v188 = vld [vmem:[#allocation8 + $0x30] sm:$0xff]
      %v189 = vld [vmem:[#allocation8 + $0x40] sm:$0xff]
      %v190 = vld [vmem:[#allocation8 + $0x50] sm:$0xff]
      %v191 = vld [vmem:[#allocation8 + $0x60] sm:$0xff]
      %v192 = vld [vmem:[#allocation8 + $0x70] sm:$0xff]
      %vm193 = vcmask 523264
      %v195 = vsel %vm193, %v184, 0
      %197 = vmatprep.subr.mxu0 0.0
      %198 = vmatpush1.msra.mxu0 %v185
      %199 = vmatprep.subr.mxu0 0.0
      %200 = vmatpush1.msra.mxu0 %v186
      %201 = vmatprep.subr.mxu0 0.0
      %202 = vmatpush1.msra.mxu0 %v187
      %203 = vmatprep.subr.mxu0 0.0
      %204 = vmatpush1.msra.mxu0 %v188
      %205 = vmatprep.subr.mxu0 0.0
      %206 = vmatpush1.msra.mxu0 %v189
      %207 = vmatprep.subr.mxu0 0.0
      %208 = vmatpush1.msra.mxu0 %v190
      %209 = vmatprep.subr.mxu0 0.0
      %210 = vmatpush1.msra.mxu0 %v191
      %211 = vmatprep.subr.mxu0 0.0
      %212 = vmatpush1.msra.mxu0 %v192
      %213 = vmatprep.subr.mxu0 0.0
      %214 = vmatpush1.msra.mxu0 0.0
      %215 = vmatprep.subr.mxu0 0.0
      %216 = vmatpush1.msra.mxu0 0.0
      %217 = vmatprep.subr.mxu0 0.0
      %218 = vmatpush1.msra.mxu0 0.0
      %219 = vmatprep.subr.mxu0 0.0
      %220 = vmatpush1.msra.mxu0 0.0
      %221 = vmatprep.subr.mxu0 0.0
      %222 = vmatpush1.msra.mxu0 0.0
      %223 = vmatprep.subr.mxu0 0.0
      %224 = vmatpush1.msra.mxu0 0.0
      %225 = vmatprep.subr.mxu0 0.0
      %226 = vmatpush1.msra.mxu0 0.0
      %227 = vmatprep.subr.mxu0 0.0
      %228 = vmatpush1.msra.mxu0 0.0
      %229 = vmatprep.subr.mxu0 0.0
      %230 = vmatpush1.msra.mxu0 0.0
      %231 = vmatprep.subr.mxu0 0.0
      %232 = vmatpush1.msra.mxu0 0.0
      %233 = vmatprep.subr.mxu0 0.0
      %234 = vmatpush1.msra.mxu0 0.0
      %235 = vmatprep.subr.mxu0 0.0
      %236 = vmatpush1.msra.mxu0 0.0
      %237 = vmatprep.subr.mxu0 0.0
      %238 = vmatpush1.msra.mxu0 0.0
      %239 = vmatprep.subr.mxu0 0.0
      %240 = vmatpush1.msra.mxu0 0.0
      %241 = vmatprep.subr.mxu0 0.0
      %242 = vmatpush1.msra.mxu0 0.0
      %243 = vmatprep.subr.mxu0 0.0
      %244 = vmatpush1.msra.mxu0 0.0
      %245 = vmatprep.subr.mxu0 0.0
      %246 = vmatpush1.msra.mxu0 0.0
      %247 = vmatprep.subr.mxu0 0.0
      %248 = vmatpush1.msra.mxu0 0.0
      %249 = vmatprep.subr.mxu0 0.0
      %250 = vmatpush1.msra.mxu0 0.0
      %251 = vmatprep.subr.mxu0 0.0
      %252 = vmatpush1.msra.mxu0 0.0
      %253 = vmatprep.subr.mxu0 0.0
      %254 = vmatpush1.msra.mxu0 0.0
      %255 = vmatprep.subr.mxu0 0.0
      %256 = vmatpush1.msra.mxu0 0.0
      %257 = vmatprep.subr.mxu0 0.0
      %258 = vmatpush1.msra.mxu0 0.0
      %259 = vmatprep.subr.mxu0 0.0
      %260 = vmatpush1.msra.mxu0 0.0
      %261 = vmatprep.mubr.f32.mxu0 0.0
      %262 = vmatmul.mubr.f32.gmra.mrb[0].mxu0 %v195
      %v263 = vpop.f32.mrb[0].mxu0
      %v264 = vadd.f32 0.0, %v263
      %v265 = vpop.f32.mrb[0].mxu0
      %266 = vdwg.mxu0
      %v268 = vlaneseq
      %v269 = vshrl.u32 %v268, 7
      %v270 = vsub.s32 1, %v269
      %v271 = vrot.slane %v80, %v270
      %v273 = vadd.f32 %v264, %v271
      %vm274 = vcmask 57344
      %v275 = vsel %vm274, %v273, -inf
      %276 = vmax.xlane.f32.xlu0 %v275
      %v277 = vpop.xlane.xlu0 %276
      %v278 = vsub.f32 %v273, %v277
      %v279 = vmul.f32 %v278, 1.442695
      %v280 = vpow.pop %v279
      %v281 = vsel %vm274, %v280, 0.0
      %282 = vadd.xlane.f32.xlu0 %v281
      %v283 = vpop.xlane.xlu0 %282
      %v284 = vrcp.pop %v283
      %v285 = vmul.f32 %v280, %v284
      %vm286 = vcmask 64512
      %v288 = vsel %vm286, %v285, 0
      %290 = vmatprep.subr.mxu0 0.0
      %291 = vmatpush1.msra.mxu0 %v157
      %292 = vmatprep.subr.mxu0 0.0
      %293 = vmatpush1.msra.mxu0 0.0
      %294 = vmatprep.subr.mxu0 0.0
      %295 = vmatpush1.msra.mxu0 0.0
      %296 = vmatprep.subr.mxu0 0.0
      %297 = vmatpush1.msra.mxu0 0.0
      %298 = vmatprep.subr.mxu0 0.0
      %299 = vmatpush1.msra.mxu0 0.0
      %300 = vmatprep.subr.mxu0 0.0
      %301 = vmatpush1.msra.mxu0 0.0
      %302 = vmatprep.subr.mxu0 0.0
      %303 = vmatpush1.msra.mxu0 0.0
      %304 = vmatprep.subr.mxu0 0.0
      %305 = vmatpush1.msra.mxu0 0.0
      %306 = vmatprep.subr.mxu0 0.0
      %307 = vmatpush1.msra.mxu0 0.0
      %308 = vmatprep.subr.mxu0 0.0
      %309 = vmatpush1.msra.mxu0 0.0
      %310 = vmatprep.subr.mxu0 0.0
      %311 = vmatpush1.msra.mxu0 0.0
      %312 = vmatprep.subr.mxu0 0.0
      %313 = vmatpush1.msra.mxu0 0.0
      %314 = vmatprep.subr.mxu0 0.0
      %315 = vmatpush1.msra.mxu0 0.0
      %316 = vmatprep.subr.mxu0 0.0
      %317 = vmatpush1.msra.mxu0 0.0
      %318 = vmatprep.subr.mxu0 0.0
      %319 = vmatpush1.msra.mxu0 0.0
      %320 = vmatprep.subr.mxu0 0.0
      %321 = vmatpush1.msra.mxu0 0.0
      %322 = vmatprep.subr.mxu0 0.0
      %323 = vmatpush1.msra.mxu0 0.0
      %324 = vmatprep.subr.mxu0 0.0
      %325 = vmatpush1.msra.mxu0 0.0
      %326 = vmatprep.subr.mxu0 0.0
      %327 = vmatpush1.msra.mxu0 0.0
      %328 = vmatprep.subr.mxu0 0.0
      %329 = vmatpush1.msra.mxu0 0.0
      %330 = vmatprep.subr.mxu0 0.0
      %331 = vmatpush1.msra.mxu0 0.0
      %332 = vmatprep.subr.mxu0 0.0
      %333 = vmatpush1.msra.mxu0 0.0
      %334 = vmatprep.subr.mxu0 0.0
      %335 = vmatpush1.msra.mxu0 0.0
      %336 = vmatprep.subr.mxu0 0.0
      %337 = vmatpush1.msra.mxu0 0.0
      %338 = vmatprep.subr.mxu0 0.0
      %339 = vmatpush1.msra.mxu0 0.0
      %340 = vmatprep.subr.mxu0 0.0
      %341 = vmatpush1.msra.mxu0 0.0
      %342 = vmatprep.subr.mxu0 0.0
      %343 = vmatpush1.msra.mxu0 0.0
      %344 = vmatprep.subr.mxu0 0.0
      %345 = vmatpush1.msra.mxu0 0.0
      %346 = vmatprep.subr.mxu0 0.0
      %347 = vmatpush1.msra.mxu0 0.0
      %348 = vmatprep.subr.mxu0 0.0
      %349 = vmatpush1.msra.mxu0 0.0
      %350 = vmatprep.subr.mxu0 0.0
      %351 = vmatpush1.msra.mxu0 0.0
      %352 = vmatprep.subr.mxu0 0.0
      %353 = vmatpush1.msra.mxu0 0.0
      %354 = vmatprep.mubr.f32.mxu0 0.0
      %355 = vmatmul.mubr.f32.gmra.mrb[0].mxu0 %v288
      %v356 = vpop.f32.mrb[0].mxu0
      %v357 = vadd.f32 0.0, %v356
      %v358 = vpop.f32.mrb[0].mxu0
      %359 = vdwg.mxu0
      %361 = vrot.lane.b32.xlu0 %v357, 8
      %v362 = vpop.permute.xlu0 %361
      %v364 = vadd.f32 %v264, %v362
      %365 = vrot.lane.b32.xlu0 %v271, 104
      %v366 = vpop.permute.xlu0 %365
      %v368 = vadd.f32 %v364, %v366
      %v369 = vmax.f32 %v368, 0.0
      %371 = vrot.lane.b32.xlu0 %v369, 120
      %v372 = vpop.permute.xlu0 %371
      %374 = vst.msk [vmem:[#allocation2] sm:$0x1] %vm161, %v372
      %v375 = vld [vmem:[#allocation2] sm:$0x1]
      %v376 = vld [vmem:[#allocation8 + $0x8] sm:$0xff]
      %v377 = vld [vmem:[#allocation8 + $0x18] sm:$0xff]
      %v378 = vld [vmem:[#allocation8 + $0x28] sm:$0xff]
      %v379 = vld [vmem:[#allocation8 + $0x38] sm:$0xff]
      %v380 = vld [vmem:[#allocation8 + $0x48] sm:$0xff]
      %v381 = vld [vmem:[#allocation8 + $0x58] sm:$0xff]
      %v382 = vld [vmem:[#allocation8 + $0x68] sm:$0xff]
      %v383 = vld [vmem:[#allocation8 + $0x78] sm:$0xff]
      %v385 = vsel %vm193, %v375, 0
      %387 = vmatprep.subr.mxu0 0.0
      %388 = vmatpush1.msra.mxu0 %v376
      %389 = vmatprep.subr.mxu0 0.0
      %390 = vmatpush1.msra.mxu0 %v377
      %391 = vmatprep.subr.mxu0 0.0
      %392 = vmatpush1.msra.mxu0 %v378
      %393 = vmatprep.subr.mxu0 0.0
      %394 = vmatpush1.msra.mxu0 %v379
      %395 = vmatprep.subr.mxu0 0.0
      %396 = vmatpush1.msra.mxu0 %v380
      %397 = vmatprep.subr.mxu0 0.0
      %398 = vmatpush1.msra.mxu0 %v381
      %399 = vmatprep.subr.mxu0 0.0
      %400 = vmatpush1.msra.mxu0 %v382
      %401 = vmatprep.subr.mxu0 0.0
      %402 = vmatpush1.msra.mxu0 %v383
      %403 = vmatprep.subr.mxu0 0.0
      %404 = vmatpush1.msra.mxu0 0.0
      %405 = vmatprep.subr.mxu0 0.0
      %406 = vmatpush1.msra.mxu0 0.0
      %407 = vmatprep.subr.mxu0 0.0
      %408 = vmatpush1.msra.mxu0 0.0
      %409 = vmatprep.subr.mxu0 0.0
      %410 = vmatpush1.msra.mxu0 0.0
      %411 = vmatprep.subr.mxu0 0.0
      %412 = vmatpush1.msra.mxu0 0.0
      %413 = vmatprep.subr.mxu0 0.0
      %414 = vmatpush1.msra.mxu0 0.0
      %415 = vmatprep.subr.mxu0 0.0
      %416 = vmatpush1.msra.mxu0 0.0
      %417 = vmatprep.subr.mxu0 0.0
      %418 = vmatpush1.msra.mxu0 0.0
      %419 = vmatprep.subr.mxu0 0.0
      %420 = vmatpush1.msra.mxu0 0.0
      %421 = vmatprep.subr.mxu0 0.0
      %422 = vmatpush1.msra.mxu0 0.0
      %423 = vmatprep.subr.mxu0 0.0
      %424 = vmatpush1.msra.mxu0 0.0
      %425 = vmatprep.subr.mxu0 0.0
      %426 = vmatpush1.msra.mxu0 0.0
      %427 = vmatprep.subr.mxu0 0.0
      %428 = vmatpush1.msra.mxu0 0.0
      %429 = vmatprep.subr.mxu0 0.0
      %430 = vmatpush1.msra.mxu0 0.0
      %431 = vmatprep.subr.mxu0 0.0
      %432 = vmatpush1.msra.mxu0 0.0
      %433 = vmatprep.subr.mxu0 0.0
      %434 = vmatpush1.msra.mxu0 0.0
      %435 = vmatprep.subr.mxu0 0.0
      %436 = vmatpush1.msra.mxu0 0.0
      %437 = vmatprep.subr.mxu0 0.0
      %438 = vmatpush1.msra.mxu0 0.0
      %439 = vmatprep.subr.mxu0 0.0
      %440 = vmatpush1.msra.mxu0 0.0
      %441 = vmatprep.subr.mxu0 0.0
      %442 = vmatpush1.msra.mxu0 0.0
      %443 = vmatprep.subr.mxu0 0.0
      %444 = vmatpush1.msra.mxu0 0.0
      %445 = vmatprep.subr.mxu0 0.0
      %446 = vmatpush1.msra.mxu0 0.0
      %447 = vmatprep.subr.mxu0 0.0
      %448 = vmatpush1.msra.mxu0 0.0
      %449 = vmatprep.subr.mxu0 0.0
      %450 = vmatpush1.msra.mxu0 0.0
      %451 = vmatprep.mubr.f32.mxu0 0.0
      %452 = vmatmul.mubr.f32.gmra.mrb[0].mxu0 %v385
      %v453 = vpop.f32.mrb[0].mxu0
      %v454 = vadd.f32 %v80, %v453
      %v455 = vpop.f32.mrb[0].mxu0
      %456 = vdwg.mxu0
      %v457 = vxor.u32 %v454, 2147483648
      %v458 = vmul.f32 %v457, 1.442695
      %v459 = vpow.pop %v458
      %v460 = vadd.f32 %v459, 1.0
      %v461 = vrcp.pop %v460
      %v462 = vmul.f32 1.0, %v461
      %464 = vrot.lane.b32.xlu0 %v454, 32
      %v465 = vpop.permute.xlu0 %464
      %v467 = vmul.f32 %v462, %v465
      %469 = vrot.lane.b32.xlu0 %v467, 64
      %v470 = vpop.permute.xlu0 %469
      %v472 = vadd.f32 %v454, %v470
      %v473 = vtanh.pop %v472
      %v474 = vsub.f32 1.0, %v462
      %476 = vrot.lane.b32.xlu0 %v473, 96
      %v477 = vpop.permute.xlu0 %476
      %v479 = vmul.f32 %v474, %v477
      %v480 = vmul.f32 %v462, %v180
      %v481 = vadd.f32 %v479, %v480
      %v482 = vld [vmem:[#allocation10] sm:$0xff]
      %v483 = vld [vmem:[#allocation10 + $0x8] sm:$0xff]
      %v484 = vld [vmem:[#allocation10 + $0x10] sm:$0xff]
      %v485 = vld [vmem:[#allocation10 + $0x18] sm:$0xff]
      %487 = vrot.lane.b32.xlu0 %v481, 96
      %v488 = vpop.permute.xlu0 %487
      %493 = vrot.lane.b32.xlu0 %v482, 96
      %v494 = vpop.permute.xlu0 %493
      %495 = vrot.lane.b32.xlu0 %v483, 96
      %v496 = vpop.permute.xlu0 %495
      %497 = vrot.lane.b32.xlu0 %v484, 96
      %v498 = vpop.permute.xlu0 %497
      %499 = vrot.lane.b32.xlu0 %v485, 96
      %v500 = vpop.permute.xlu0 %499
      %505 = vrot.lane.b32.xlu0 %v271, 64
      %v506 = vpop.permute.xlu0 %505
      %v508 = vsel %vm86, %v488, 0
      %510 = vmatprep.subr.mxu0 0.0
      %511 = vmatpush1.msra.mxu0 %v494
      %512 = vmatprep.subr.mxu0 0.0
      %513 = vmatpush1.msra.mxu0 %v496
      %514 = vmatprep.subr.mxu0 0.0
      %515 = vmatpush1.msra.mxu0 %v498
      %516 = vmatprep.subr.mxu0 0.0
      %517 = vmatpush1.msra.mxu0 %v500
      %518 = vmatprep.subr.mxu0 0.0
      %519 = vmatpush1.msra.mxu0 0.0
      %520 = vmatprep.subr.mxu0 0.0
      %521 = vmatpush1.msra.mxu0 0.0
      %522 = vmatprep.subr.mxu0 0.0
      %523 = vmatpush1.msra.mxu0 0.0
      %524 = vmatprep.subr.mxu0 0.0
      %525 = vmatpush1.msra.mxu0 0.0
      %526 = vmatprep.subr.mxu0 0.0
      %527 = vmatpush1.msra.mxu0 0.0
      %528 = vmatprep.subr.mxu0 0.0
      %529 = vmatpush1.msra.mxu0 0.0
      %530 = vmatprep.subr.mxu0 0.0
      %531 = vmatpush1.msra.mxu0 0.0
      %532 = vmatprep.subr.mxu0 0.0
      %533 = vmatpush1.msra.mxu0 0.0
      %534 = vmatprep.subr.mxu0 0.0
      %535 = vmatpush1.msra.mxu0 0.0
      %536 = vmatprep.subr.mxu0 0.0
      %537 = vmatpush1.msra.mxu0 0.0
      %538 = vmatprep.subr.mxu0 0.0
      %539 = vmatpush1.msra.mxu0 0.0
      %540 = vmatprep.subr.mxu0 0.0
      %541 = vmatpush1.msra.mxu0 0.0
      %542 = vmatprep.subr.mxu0 0.0
      %543 = vmatpush1.msra.mxu0 0.0
      %544 = vmatprep.subr.mxu0 0.0
      %545 = vmatpush1.msra.mxu0 0.0
      %546 = vmatprep.subr.mxu0 0.0
      %547 = vmatpush1.msra.mxu0 0.0
      %548 = vmatprep.subr.mxu0 0.0
      %549 = vmatpush1.msra.mxu0 0.0
      %550 = vmatprep.subr.mxu0 0.0
      %551 = vmatpush1.msra.mxu0 0.0
      %552 = vmatprep.subr.mxu0 0.0
      %553 = vmatpush1.msra.mxu0 0.0
      %554 = vmatprep.subr.mxu0 0.0
      %555 = vmatpush1.msra.mxu0 0.0
      %556 = vmatprep.subr.mxu0 0.0
      %557 = vmatpush1.msra.mxu0 0.0
      %558 = vmatprep.subr.mxu0 0.0
      %559 = vmatpush1.msra.mxu0 0.0
      %560 = vmatprep.subr.mxu0 0.0
      %561 = vmatpush1.msra.mxu0 0.0
      %562 = vmatprep.subr.mxu0 0.0
      %563 = vmatpush1.msra.mxu0 0.0
      %564 = vmatprep.subr.mxu0 0.0
      %565 = vmatpush1.msra.mxu0 0.0
      %566 = vmatprep.subr.mxu0 0.0
      %567 = vmatpush1.msra.mxu0 0.0
      %568 = vmatprep.subr.mxu0 0.0
      %569 = vmatpush1.msra.mxu0 0.0
      %570 = vmatprep.subr.mxu0 0.0
      %571 = vmatpush1.msra.mxu0 0.0
      %572 = vmatprep.subr.mxu0 0.0
      %573 = vmatpush1.msra.mxu0 0.0
      %574 = vmatprep.mubr.f32.mxu0 0.0
      %575 = vmatmul.mubr.f32.gmra.mrb[0].mxu0 %v508
      %v576 = vpop.f32.mrb[0].mxu0
      %v577 = vadd.f32 %v506, %v576
      %v578 = vpop.f32.mrb[0].mxu0
      %579 = vdwg.mxu0
      %vm580 = vcmask 122880
      %v581 = vsel %vm580, %v577, -inf
      %582 = vmax.xlane.f32.xlu0 %v581
      %v583 = vpop.xlane.xlu0 %582
      %v584 = vsub.f32 %v577, %v583
      %v585 = vmul.f32 %v584, 1.442695
      %v586 = vpow.pop %v585
      %v587 = vsel %vm580, %v586, 0.0
      %588 = vadd.xlane.f32.xlu0 %v587
      %v589 = vpop.xlane.xlu0 %588
      %v590 = vlog2.pop %v589
      %v591 = vmul.f32 %v590, 0.6931472
      %v592 = vsub.f32 %v584, %v591
      %594 = vst.msk [vmem:[#allocation3] sm:$0x1] %vm161, %v488
      %595 = vrot.lane.b32.xlu0 %v481, 112
      %v596 = vpop.permute.xlu0 %595
      %598 = vrot.lane.b32.xlu0 %v285, 48
      %v599 = vpop.permute.xlu0 %598
      %vm601 = vcmask 130048
      %v602 = vsel %vm601, %v592, %v596
      %vm603 = vcmask 392192
      %v604 = vsel %vm603, %v602, %v599
      %vm605 = vcmask 457728
      %v606 = vsel %vm605, %v604, 0.0
      %s607 = scalar_lea.vmem %s7, %s164
      %608 = vst [vmem:[%s607] sm:$0x1] %v606
    $region50: #{attn_decoder_decode.1} parent=1 // loop_footer
      %s168 = sadd.s32 1, %s164
    $region51: #{attn_decoder_decode.1} parent=1 // loop_footer_branch
      %163 = sbr.rel target = $region47
    $region52: #{attn_decoder_decode.1} parent=1 // loop_exit
      _
    // Predicated region
    $region53: #{attn_decoder_decode.1} parent=1 // pred_check
      _
    $region54: #{attn_decoder_decode.1} parent=1 // pred_check_branch
      %610 = sbr.rel (0) target = $region56
    $region55: #{attn_decoder_decode.1} parent=1 // pred_region
      _
    $region56: #{attn_decoder_decode.1} parent=1 // pred_fallthru
      _
    // Predicated region
    $region57: #{attn_decoder_decode.1} parent=1 // pred_check
      _
    $region58: #{attn_decoder_decode.1} parent=1 // pred_check_branch
      %612 = sbr.rel (0) target = $region60
    $region59: #{attn_decoder_decode.1} parent=1 // pred_region
      _
    $region60: #{attn_decoder_decode.1} parent=1 // pred_fallthru
      _
    %613 = vsyncpa [#allocation5], 1
    %614 = vsyncpa [#allocation9], 1
    %615 = vsyncpa [#allocation6], 1

</llo_original>
